<compile_context>
chip_gen: v6e
topology: v6e:2x2x1
jax: 0.10.0
libtpu: 0.0.40
codegen_flags: <defaults>
</compile_context>

<pallas_src>
import jax
import jax.numpy as jnp
from jax.experimental import pallas as pl
from jax.experimental.pallas import tpu as pltpu

_LANE = 128


def _round_up(x: int, m: int) -> int:
    return ((x + m - 1) // m) * m


def _detect_num_tensorcores() -> int:
    """Best-effort TensorCores-per-chip (2 on v7x, 1 on v5e/v6e); safe fallback = 1."""
    try:
        dev = jax.devices()[0]
        if dev.platform != "tpu":
            return 1
        for attr in ("num_cores", "core_count", "num_cores_per_chip"):
            n = getattr(dev, attr, None)
            if isinstance(n, int) and n > 0:
                return n
    except Exception:
        pass
    return 1


def _derive_batch_tile(batch: int, in_f: int, out_f: int, itemsize: int,
                       *, vmem_budget_bytes: int, num_cores: int):
    """Pick the lane-axis (batch) tile `tb` and padded batch `b_pad`.

    tb is sized so the double-buffered (in_f, tb) + (out_f, tb) tiles fit the
    VMEM budget, then shrunk just enough to (a) cover B in >= num_cores grid
    steps on multi-TC chips and (b) minimize lane padding.
    """
    bytes_per_lane = 2 * (in_f + out_f) * itemsize           # double-buffered
    tb_cap = max(_LANE, (vmem_budget_bytes // bytes_per_lane) // _LANE * _LANE)
    b_lanes = _round_up(batch, _LANE)
    steps_for_vmem = pl.cdiv(b_lanes, tb_cap)
    steps_for_cores = min(max(1, num_cores), b_lanes // _LANE)  # don't split tiny batches
    steps = max(steps_for_vmem, steps_for_cores, 1)
    tb = min(tb_cap, _round_up(pl.cdiv(b_lanes, steps), _LANE))
    b_pad = _round_up(batch, tb)
    return tb, b_pad


def _linear_kernel(xt_ref, w_ref, b_ref, o_ref):
    # xt_ref: (IN, TB)   w_ref: (OUT, IN)   b_ref: (OUT, 1)   o_ref: (OUT, TB)
    # Contract W's last axis with x_t's first axis -> straight to the MXU,
    # no XLU transpose; the lane axis (TB) stays dense.
    y = jax.lax.dot_general(
        w_ref[...],
        xt_ref[...],
        dimension_numbers=(((1,), (0,)), ((), ())),
        preferred_element_type=jnp.float32,
    )
    o_ref[...] = (y + b_ref[...]).astype(o_ref.dtype)


def linear_forward_fb(x_t: jax.Array, weight: jax.Array, bias: jax.Array,
                      *, vmem_budget_bytes: int = 8 << 20,
                      num_cores: int | None = None) -> jax.Array:
    """Features-major linear: x_t (in_f, B) -> (out_f, B). No wrapper transposes."""
    in_f, B = x_t.shape
    out_f, in_f_w = weight.shape
    assert in_f == in_f_w, "weight/in_features mismatch"

    if num_cores is None:
        num_cores = _detect_num_tensorcores()
    itemsize = jnp.dtype(x_t.dtype).itemsize
    tb, b_pad = _derive_batch_tile(B, in_f, out_f, itemsize,
                                   vmem_budget_bytes=vmem_budget_bytes,
                                   num_cores=num_cores)

    if b_pad != B:
        # Zero-padded batch columns produce bias-only outputs, sliced off below.
        x_t = jnp.pad(x_t, ((0, 0), (0, b_pad - B)))
    bias2d = bias.reshape(out_f, 1)                 # single resident VMEM tile

    grid = (b_pad // tb,)

    # Advisory cost: actual in-kernel DMA volume (padded tiles), not logical sizes.
    cost = pl.CostEstimate(
        flops=2 * b_pad * in_f * out_f,
        transcendentals=0,
        bytes_accessed=(in_f * b_pad + out_f * b_pad + weight.size + out_f) * itemsize,
    )

    out_t = pl.pallas_call(
        _linear_kernel,
        out_shape=jax.ShapeDtypeStruct((out_f, b_pad), x_t.dtype),
        grid=grid,
        in_specs=[
            # x_t: tiled along the lane/batch axis (double-buffered per grid step).
            pl.BlockSpec((in_f, tb), lambda i: (0, i)),
            # weight & bias: constant index_map -> stay VMEM-resident, no re-DMA.
            pl.BlockSpec((out_f, in_f), lambda i: (0, 0)),
            pl.BlockSpec((out_f, 1), lambda i: (0, 0)),
        ],
        out_specs=pl.BlockSpec((out_f, tb), lambda i: (0, i)),
        compiler_params=pltpu.CompilerParams(
            # Batch tiles are independent -> shards across both TCs on v7x;
            # harmless on single-TC v5e/v6e (where grid collapses to 1 step).
            dimension_semantics=("parallel",),
        ),
        cost_estimate=cost,
    )(x_t, weight, bias2d)

    if b_pad != B:
        out_t = out_t[:, :B]
    return out_t


def linear_forward(x: jax.Array, weight: jax.Array, bias: jax.Array,
                   **kwargs) -> jax.Array:
    """PyTorch nn.Linear contract: x (B, in_f) -> (B, out_f).

    NOTE: the x.T / out.T here are wrapper-side HBM passes; for large B keep
    activations features-major across the model and call linear_forward_fb
    directly to avoid them entirely.
    """
    return linear_forward_fb(x.T, weight, bias, **kwargs).T


def init_params(key: jax.Array, in_features: int = 4, out_features: int = 5):
    """Deterministic init mimicking nn.Linear's default (uniform +/- 1/sqrt(in))."""
    # TODO(synk): checkpoint loading (load_checkpoint_to_module) is host-side I/O,
    # not a kernel concern; parameters are initialized deterministically in-script.
    kw, kb = jax.random.split(key)
    bound = 1.0 / jnp.sqrt(jnp.float32(in_features))
    weight = jax.random.uniform(
        kw, (out_features, in_features), jnp.float32, -bound, bound
    )
    bias = jax.random.uniform(kb, (out_features,), jnp.float32, -bound, bound)
    return weight, bias


if __name__ == "__main__":
    key = jax.random.PRNGKey(0)
    k_x, k_p, k_x2 = jax.random.split(key, 3)

    B, IN, OUT = 2, 4, 5
    weight, bias = init_params(k_p, IN, OUT)

    # Spec-sized input (batch=2, features=4): single fat grid step.
    x = jax.random.normal(k_x, (B, IN), dtype=jnp.float32)
    y = jax.block_until_ready(linear_forward(x, weight, bias))
    y_ref = x @ weight.T + bias
    assert y.shape == (B, OUT)
    assert jnp.allclose(y, y_ref, atol=1e-5, rtol=1e-5)

    # Larger, non-aligned batch on the transpose-free features-major path.
    # A small VMEM budget + num_cores=2 forces a multi-step "parallel" grid
    # (exercises the v7x-style batch-sharded path; harmless on 1-TC chips).
    B2 = 1000
    x2 = jax.random.normal(k_x2, (B2, IN), dtype=jnp.float32)
    y2_t = jax.block_until_ready(
        linear_forward_fb(x2.T, weight, bias, vmem_budget_bytes=40_000, num_cores=2)
    )
    y2_ref = x2 @ weight.T + bias
    assert y2_t.shape == (OUT, B2)
    assert jnp.allclose(y2_t.T, y2_ref, atol=1e-5, rtol=1e-5)

    print("KERNEL_OK")
</pallas_src>

<mosaic_0001>
module attributes {stable_mosaic.version = 11 : i64} {
  func.func @_linear_kernel(%arg0: i32, %arg1: memref<4x128xf32, #tpu.memory_space<vmem>>, %arg2: memref<5x4xf32, #tpu.memory_space<vmem>>, %arg3: memref<5x1xf32, #tpu.memory_space<vmem>>, %arg4: memref<5x128xf32, #tpu.memory_space<vmem>>) attributes {dimension_semantics = [#tpu.dimension_semantics<parallel>], iteration_bounds = array<i64: 1>, scalar_prefetch = 0 : i64, scratch_operands = 0 : i64, tpu.core_type = #tpu.core_type<tc>, window_params = [{transform_indices = @transform_0, window_bounds = array<i64: 4, 128>}, {pipeline_mode = #tpu.pipeline_mode<synchronous>, transform_indices = @transform_1, window_bounds = array<i64: 5, 4>}, {pipeline_mode = #tpu.pipeline_mode<synchronous>, transform_indices = @transform_2, window_bounds = array<i64: 5, 1>}, {transform_indices = @transform_3, window_bounds = array<i64: 5, 128>}]} {
    %c0 = arith.constant 0 : index
    %c0_0 = arith.constant 0 : index
    %0 = vector.load %arg2[%c0, %c0_0] : memref<5x4xf32, #tpu.memory_space<vmem>>, vector<5x4xf32>
    %c0_1 = arith.constant 0 : index
    %c0_2 = arith.constant 0 : index
    %1 = vector.load %arg1[%c0_1, %c0_2] : memref<4x128xf32, #tpu.memory_space<vmem>>, vector<4x128xf32>
    %cst = arith.constant dense<0.000000e+00> : vector<5x128xf32>
    %2 = tpu.matmul %0, %1, %cst {dimension_numbers = #tpu.dot_dimension_numbers<[1], [0], [0], [1], [0, 0, 1, 1], [], []>} : vector<5x4xf32>, vector<4x128xf32>, vector<5x128xf32> -> vector<5x128xf32>
    %c0_3 = arith.constant 0 : index
    %c0_4 = arith.constant 0 : index
    %3 = vector.load %arg3[%c0_3, %c0_4] : memref<5x1xf32, #tpu.memory_space<vmem>>, vector<5x1xf32>
    %4 = vector.broadcast %3 : vector<5x1xf32> to vector<5x128xf32>
    %5 = arith.addf %2, %4 : vector<5x128xf32>
    %c0_5 = arith.constant 0 : index
    %c0_6 = arith.constant 0 : index
    %6 = vector.load %arg4[%c0_5, %c0_6] : memref<5x128xf32, #tpu.memory_space<vmem>>, vector<5x128xf32>
    tpu.vector_store %arg4[%c0_5, %c0_6], %5 {strides = array<i32>} : memref<5x128xf32, #tpu.memory_space<vmem>>, vector<5x128xf32>,
    return
  }
  func.func @transform_0(%arg0: i32) -> (i32, i32) {
    %c0_i32 = arith.constant 0 : i32
    %c0_i32_0 = arith.constant 0 : i32
    return %c0_i32, %arg0 : i32, i32
  }
  func.func @transform_1(%arg0: i32) -> (i32, i32) {
    %c0_i32 = arith.constant 0 : i32
    %c0_i32_0 = arith.constant 0 : i32
    %c0_i32_1 = arith.constant 0 : i32
    return %c0_i32, %c0_i32_0 : i32, i32
  }
  func.func @transform_2(%arg0: i32) -> (i32, i32) {
    %c0_i32 = arith.constant 0 : i32
    %c0_i32_0 = arith.constant 0 : i32
    %c0_i32_1 = arith.constant 0 : i32
    return %c0_i32, %c0_i32_0 : i32, i32
  }
  func.func @transform_3(%arg0: i32) -> (i32, i32) {
    %c0_i32 = arith.constant 0 : i32
    %c0_i32_0 = arith.constant 0 : i32
    return %c0_i32, %arg0 : i32, i32
  }
}

</mosaic_0001>

<llo_original>
// kernel: tpu_custom_call.1
$region0: #{tpu_custom_call.1}
  #allocation0 [shape = 'u32[]', space=smem, size = 0x4, offset = 0x4, fixed_abs, tag = 'smem constant byte address 0x4 - core index']
  #allocation1 [shape = 'u32[144,128]{1,0:T(1,128)}', space=vmem, size = 0x12000, scoped, tag = 'internal scratch']
  %s0 = inlined_call_operand.vmem [shape: f32[4,128], index: 0, kind: input, shape index: {}]
  %s1 = inlined_call_operand.vmem [shape: f32[5,4], index: 1, kind: input, shape index: {}]
  %s2 = inlined_call_operand.vmem [shape: f32[5,1], index: 2, kind: input, shape index: {}]
  %s3 = inlined_call_operand.hbm [shape: f32[5,128], index: 3, kind: output, shape index: {}]
  %s4 = sld [smem:[#allocation0]]
  $region22: #{tpu_custom_call.1} parent=0
    _
  %s6 = ssub.s32 1, %s4
  %s7 = scalar_select 0, %s6, %s4
  $region1: #{tpu_custom_call.1} parent=0
    #allocation2 [shape = 'u8[4096]{0}', space=vmem, size = 0x1000, scoped, tag = 'output window, operand 0, single buffered']
    #allocation3 [shape = 's32[1]{0}', space=sflag, size = 0x4, scoped, tag = 'scoped memory for tpu_custom_call.1']
    %8 = vsyncpa [#allocation3], 0
    // Predicated region
    $region2: #{tpu_custom_call.1} parent=1 // pred_check
      _
    $region3: #{tpu_custom_call.1} parent=1 // pred_check_branch
      %10 = sbr.rel (0) target = $region5
    $region4: #{tpu_custom_call.1} parent=1 // pred_region
      _
    $region5: #{tpu_custom_call.1} parent=1 // pred_fallthru
      _
    // Predicated region
    $region6: #{tpu_custom_call.1} parent=1 // pred_check
      _
    $region7: #{tpu_custom_call.1} parent=1 // pred_check_branch
      %12 = sbr.rel (0) target = $region9
    $region8: #{tpu_custom_call.1} parent=1 // pred_region
      _
    $region9: #{tpu_custom_call.1} parent=1 // pred_fallthru
      _
    // Predicated region
    $region10: #{tpu_custom_call.1} parent=1 // pred_check
      _
    $region11: #{tpu_custom_call.1} parent=1 // pred_check_branch
      %14 = sbr.rel (0) target = $region13
    $region12: #{tpu_custom_call.1} parent=1 // pred_region
      _
    $region13: #{tpu_custom_call.1} parent=1 // pred_fallthru
      _
    %v15 = vld [vmem:[%s1] sm:$0x1f]
    %v16 = vld [vmem:[%s0] sm:$0xf]
    %v17 = vld [vmem:[%s2] sm:$0x1f]
    %19 = vset.pattern.permute.xlu0 0
    %20 = vperm.xlu0 %19, %v17
    %v21 = vpop.permute.xlu0 %20
    %vm23 = vcmask 31744
    %v25 = vsel %vm23, %v15, 0
    %vm27 = vcmask 1043456
    %v29 = vsel %vm27, %v16, 0
    %31 = vmatprep.subr.mxu0 0.0
    %32 = vmatpush1.msra.mxu0 0.0
    %33 = vmatprep.subr.mxu0 0.0
    %34 = vmatpush1.msra.mxu0 0.0
    %35 = vmatprep.subr.mxu0 0.0
    %36 = vmatpush1.msra.mxu0 0.0
    %37 = vmatprep.subr.mxu0 0.0
    %38 = vmatpush1.msra.mxu0 0.0
    %39 = vmatprep.subr.mxu0 0.0
    %40 = vmatpush1.msra.mxu0 0.0
    %41 = vmatprep.subr.mxu0 0.0
    %42 = vmatpush1.msra.mxu0 0.0
    %43 = vmatprep.subr.mxu0 0.0
    %44 = vmatpush1.msra.mxu0 0.0
    %45 = vmatprep.subr.mxu0 0.0
    %46 = vmatpush1.msra.mxu0 0.0
    %47 = vmatprep.subr.mxu0 0.0
    %48 = vmatpush1.msra.mxu0 0.0
    %49 = vmatprep.subr.mxu0 0.0
    %50 = vmatpush1.msra.mxu0 0.0
    %51 = vmatprep.subr.mxu0 0.0
    %52 = vmatpush1.msra.mxu0 0.0
    %53 = vmatprep.subr.mxu0 0.0
    %54 = vmatpush1.msra.mxu0 0.0
    %55 = vmatprep.subr.mxu0 0.0
    %56 = vmatpush1.msra.mxu0 0.0
    %57 = vmatprep.subr.mxu0 0.0
    %58 = vmatpush1.msra.mxu0 0.0
    %59 = vmatprep.subr.mxu0 0.0
    %60 = vmatpush1.msra.mxu0 0.0
    %61 = vmatprep.subr.mxu0 0.0
    %62 = vmatpush1.msra.mxu0 %v29
    %63 = vmatprep.subr.mxu0 0.0
    %64 = vmatpush2.msra.mxu0 0.0
    %65 = vmatprep.subr.mxu0 0.0
    %66 = vmatpush2.msra.mxu0 0.0
    %67 = vmatprep.subr.mxu0 0.0
    %68 = vmatpush2.msra.mxu0 0.0
    %69 = vmatprep.subr.mxu0 0.0
    %70 = vmatpush2.msra.mxu0 0.0
    %71 = vmatprep.subr.mxu0 0.0
    %72 = vmatpush2.msra.mxu0 0.0
    %73 = vmatprep.subr.mxu0 0.0
    %74 = vmatpush2.msra.mxu0 0.0
    %75 = vmatprep.subr.mxu0 0.0
    %76 = vmatpush2.msra.mxu0 0.0
    %77 = vmatprep.subr.mxu0 0.0
    %78 = vmatpush2.msra.mxu0 0.0
    %79 = vmatprep.subr.mxu0 0.0
    %80 = vmatpush2.msra.mxu0 0.0
    %81 = vmatprep.subr.mxu0 0.0
    %82 = vmatpush2.msra.mxu0 0.0
    %83 = vmatprep.subr.mxu0 0.0
    %84 = vmatpush2.msra.mxu0 0.0
    %85 = vmatprep.subr.mxu0 0.0
    %86 = vmatpush2.msra.mxu0 0.0
    %87 = vmatprep.subr.mxu0 0.0
    %88 = vmatpush2.msra.mxu0 0.0
    %89 = vmatprep.subr.mxu0 0.0
    %90 = vmatpush2.msra.mxu0 0.0
    %91 = vmatprep.subr.mxu0 0.0
    %92 = vmatpush2.msra.mxu0 0.0
    %93 = vmatprep.subr.mxu0 0.0
    %94 = vmatpush2.msra.mxu0 0.0
    %95 = vmatprep.mubr.f32.mxu0 0.0
    %96 = vmatmul.mubr.f32.gmra.mxu0 %v25
    %v97 = vpop.f32.mrf.mxu0
    %v98 = vadd.f32 %v21, %v97
    %v99 = vpop.f32.mrf.mxu0
    %100 = vdwg.mxu0
    %101 = vst [vmem:[#allocation2] sm:$0x1f] %v98
    // Predicated region
    $region14: #{tpu_custom_call.1} parent=1 // pred_check
      _
    $region15: #{tpu_custom_call.1} parent=1 // pred_check_branch
      %103 = sbr.rel (0) target = $region17
    $region16: #{tpu_custom_call.1} parent=1 // pred_region
      %s105 = ssub.s32 128, 128
      %106 = vsyncadd [#allocation3], %s105
      %s108 = sshll.u32 [#allocation2], 4
      %s109 = int_to_ptr.vmem [resolvable:$true] %s108
      %111 = dma.vmem_to_hbm [thread:$0]  %s109, 128, %s3, [#allocation3]
    $region17: #{tpu_custom_call.1} parent=1 // pred_fallthru
      _
    // Predicated region
    $region18: #{tpu_custom_call.1} parent=1 // pred_check
      _
    $region19: #{tpu_custom_call.1} parent=1 // pred_check_branch
      %113 = sbr.rel (0) target = $region21
    $region20: #{tpu_custom_call.1} parent=1 // pred_region
      %114 = dma.done [#allocation3], 128
    $region21: #{tpu_custom_call.1} parent=1 // pred_fallthru
      _
    %115 = vsyncpa [#allocation3], 1

</llo_original>
